<compile_context>
chip_gen: v6e
topology: v6e:2x2x1
jax: 0.10.0
libtpu: 0.0.40
codegen_flags: <defaults>
</compile_context>

<pallas_src>
import functools

import jax
import jax.numpy as jnp
from jax.experimental import pallas as pl
from jax.experimental.pallas import tpu as pltpu


def _bond_mlp_kernel(s1_ref, s2_ref, bd_ref, st_ref,
                     w1a_ref, w1b_ref, w1c_ref, w1d_ref, b1_ref,
                     w2_ref, b2_ref, w3_ref, b3_ref, o_ref):
    # ---- fc1: split-K matmul (replaces concat([s1,s2,b,st]) @ W1), f32 acc ----
    h = jnp.dot(s1_ref[...], w1a_ref[...], preferred_element_type=jnp.float32)
    h = h + jnp.dot(s2_ref[...], w1b_ref[...], preferred_element_type=jnp.float32)
    h = h + jnp.dot(bd_ref[...], w1c_ref[...], preferred_element_type=jnp.float32)
    h = h + jnp.dot(st_ref[...], w1d_ref[...], preferred_element_type=jnp.float32)
    h = jnp.maximum(h + b1_ref[...], 0.0)

    # ---- fc2 ----
    h = h.astype(w2_ref.dtype)
    h = jnp.dot(h, w2_ref[...], preferred_element_type=jnp.float32)
    h = jnp.maximum(h + b2_ref[...], 0.0)

    # ---- fc3 (output width padded to a multiple of 128 -> unmasked stores) ----
    h = h.astype(w3_ref.dtype)
    y = jnp.dot(h, w3_ref[...], preferred_element_type=jnp.float32)
    y = jnp.maximum(y + b3_ref[...], 0.0)
    o_ref[...] = y.astype(o_ref.dtype)


def _round_up(x, m):
    return ((x + m - 1) // m) * m


def bond_update_pallas(sites, bonds, states, indices1, indices2, graph_to_bonds,
                       params, *, tile_e=512, compute_dtype=jnp.bfloat16):
    """Forward pass of BondUpdate.

    sites:  (num_sites, site_len)
    bonds:  (num_bonds, bond_len)
    states: (num_graphs, state_len)
    indices1, indices2, graph_to_bonds: (num_bonds,) int32
    params: (w1, b1, w2, b2, w3, b3) with weights stored [in, out].
    """
    w1, b1, w2, b2, w3, b3 = params
    site_len = sites.shape[1]
    bond_len = bonds.shape[1]
    state_len = states.shape[1]
    num_bonds = bonds.shape[0]
    h1 = w1.shape[1]
    h2 = w2.shape[1]
    out_dtype = bonds.dtype

    # Gathers (cheap XLA glue).  No concat: avoids an extra HBM round trip of a
    # (num_bonds, in_dim) activation that the kernel would immediately re-read.
    sites1 = jnp.take(sites, indices1, axis=0)
    sites2 = jnp.take(sites, indices2, axis=0)
    states_g = jnp.take(states, graph_to_bonds, axis=0)

    # Row tile: multiple of 8, no larger than the (padded) row count.
    tile = max(8, min(tile_e, _round_up(num_bonds, 8)))
    tile = _round_up(tile, 8)
    padded_e = _round_up(num_bonds, tile)
    grid = (padded_e // tile,)

    def pad_rows(x):
        x = x.astype(compute_dtype)
        if padded_e != num_bonds:
            x = jnp.pad(x, ((0, padded_e - num_bonds), (0, 0)))
        return x

    s1 = pad_rows(sites1)
    s2 = pad_rows(sites2)
    bd = pad_rows(bonds)
    st = pad_rows(states_g)

    # Lane-dense hidden / output widths via zero-padded weights & biases.
    h1p = _round_up(h1, 128)
    h2p = _round_up(h2, 128)
    outp = _round_up(bond_len, 128)

    def pad_w(w, rows, cols):
        return jnp.pad(
            w, ((0, rows - w.shape[0]), (0, cols - w.shape[1]))
        ).astype(compute_dtype)

    def pad_b(b, cols):
        b = b.reshape(1, -1)
        return jnp.pad(b, ((0, 0), (0, cols - b.shape[1]))).astype(jnp.float32)

    # Split fc1's weight row-wise to match the four un-concatenated inputs.
    w1a = pad_w(w1[:site_len], site_len, h1p)
    w1b = pad_w(w1[site_len:2 * site_len], site_len, h1p)
    w1c = pad_w(w1[2 * site_len:2 * site_len + bond_len], bond_len, h1p)
    w1d = pad_w(w1[2 * site_len + bond_len:], state_len, h1p)
    b1p = pad_b(b1, h1p)
    w2p = pad_w(w2, h1p, h2p)
    b2p = pad_b(b2, h2p)
    w3p = pad_w(w3, h2p, outp)
    b3p = pad_b(b3, outp)

    const = lambda i: (0, 0)   # resident weights / biases
    rows = lambda i: (i, 0)    # row-tiled activations

    out = pl.pallas_call(
        _bond_mlp_kernel,
        out_shape=jax.ShapeDtypeStruct((padded_e, outp), out_dtype),
        grid_spec=pltpu.PrefetchScalarGridSpec(
            num_scalar_prefetch=0,
            grid=grid,
            in_specs=[
                pl.BlockSpec((tile, site_len), rows),    # sites1 rows
                pl.BlockSpec((tile, site_len), rows),    # sites2 rows
                pl.BlockSpec((tile, bond_len), rows),    # bond rows
                pl.BlockSpec((tile, state_len), rows),   # state rows
                pl.BlockSpec((site_len, h1p), const),    # w1 (sites1 slice)
                pl.BlockSpec((site_len, h1p), const),    # w1 (sites2 slice)
                pl.BlockSpec((bond_len, h1p), const),    # w1 (bonds slice)
                pl.BlockSpec((state_len, h1p), const),   # w1 (states slice)
                pl.BlockSpec((1, h1p), const),           # b1
                pl.BlockSpec((h1p, h2p), const),         # w2
                pl.BlockSpec((1, h2p), const),           # b2
                pl.BlockSpec((h2p, outp), const),        # w3
                pl.BlockSpec((1, outp), const),          # b3
            ],
            out_specs=pl.BlockSpec((tile, outp), rows),
        ),
        compiler_params=pltpu.CompilerParams(
            dimension_semantics=("parallel",)),
    )(s1, s2, bd, st, w1a, w1b, w1c, w1d, b1p, w2p, b2p, w3p, b3p)

    # Slice away the row padding and the lane padding of the output.
    return out[:num_bonds, :bond_len]


def _reference(sites, bonds, states, i1, i2, g2b, params):
    w1, b1, w2, b2, w3, b3 = params
    v = jnp.concatenate(
        (jnp.take(sites, i1, 0), jnp.take(sites, i2, 0), bonds,
         jnp.take(states, g2b, 0)), axis=1)
    v = jax.nn.relu(v @ w1 + b1.reshape(-1))
    v = jax.nn.relu(v @ w2 + b2.reshape(-1))
    return jax.nn.relu(v @ w3 + b3.reshape(-1))


if __name__ == "__main__":
    # Small module configuration (matches the PyTorch module's constructor).
    site_len, bond_len, state_len = 16, 32, 8
    h1, h2 = 64, 32
    num_sites, num_graphs = 12, 3
    num_bonds = 50                       # deliberately NOT a multiple of the tile
    in_dim = 2 * site_len + bond_len + state_len  # 72

    key = jax.random.PRNGKey(0)
    ks = jax.random.split(key, 12)

    def init_linear(kw, kb, fan_in, fan_out):
        bound = 1.0 / (fan_in ** 0.5)
        w = jax.random.uniform(kw, (fan_in, fan_out), jnp.float32, -bound, bound)
        b = jax.random.uniform(kb, (1, fan_out), jnp.float32, -bound, bound)
        return w, b

    w1, b1 = init_linear(ks[0], ks[1], in_dim, h1)
    w2, b2 = init_linear(ks[2], ks[3], h1, h2)
    w3, b3 = init_linear(ks[4], ks[5], h2, bond_len)
    params = (w1, b1, w2, b2, w3, b3)

    sites = jax.random.normal(ks[6], (num_sites, site_len), jnp.float32)
    bonds = jax.random.normal(ks[7], (num_bonds, bond_len), jnp.float32)
    states = jax.random.normal(ks[8], (num_graphs, state_len), jnp.float32)
    indices1 = jax.random.randint(ks[9], (num_bonds,), 0, num_sites, jnp.int32)
    indices2 = jax.random.randint(ks[10], (num_bonds,), 0, num_sites, jnp.int32)
    graph_to_bonds = jax.random.randint(ks[11], (num_bonds,), 0, num_graphs, jnp.int32)

    ref = _reference(sites, bonds, states, indices1, indices2,
                     graph_to_bonds, params)

    # Exact-path check (f32 compute inside the kernel).
    out_f32 = bond_update_pallas(sites, bonds, states, indices1, indices2,
                                 graph_to_bonds, params,
                                 tile_e=512, compute_dtype=jnp.float32)
    out_f32 = jax.block_until_ready(out_f32)
    assert out_f32.shape == (num_bonds, bond_len)
    assert jnp.allclose(out_f32, ref, atol=1e-5, rtol=1e-5), "f32 mismatch vs reference"

    # Default fast path: bf16 inputs/weights, f32 accumulation.
    out_bf16 = bond_update_pallas(sites, bonds, states, indices1, indices2,
                                  graph_to_bonds, params,
                                  tile_e=512, compute_dtype=jnp.bfloat16)
    out_bf16 = jax.block_until_ready(out_bf16)
    assert out_bf16.shape == (num_bonds, bond_len)
    assert jnp.allclose(out_bf16, ref, atol=5e-2, rtol=5e-2), "bf16 mismatch vs reference"

    print("KERNEL_OK")
</pallas_src>

<mosaic_0001>
module attributes {stable_mosaic.version = 11 : i64} {
  func.func @_bond_mlp_kernel(%arg0: i32, %arg1: memref<56x16xf32, #tpu.memory_space<vmem>>, %arg2: memref<56x16xf32, #tpu.memory_space<vmem>>, %arg3: memref<56x32xf32, #tpu.memory_space<vmem>>, %arg4: memref<56x8xf32, #tpu.memory_space<vmem>>, %arg5: memref<16x128xf32, #tpu.memory_space<vmem>>, %arg6: memref<16x128xf32, #tpu.memory_space<vmem>>, %arg7: memref<32x128xf32, #tpu.memory_space<vmem>>, %arg8: memref<8x128xf32, #tpu.memory_space<vmem>>, %arg9: memref<1x128xf32, #tpu.memory_space<vmem>>, %arg10: memref<128x128xf32, #tpu.memory_space<vmem>>, %arg11: memref<1x128xf32, #tpu.memory_space<vmem>>, %arg12: memref<128x128xf32, #tpu.memory_space<vmem>>, %arg13: memref<1x128xf32, #tpu.memory_space<vmem>>, %arg14: memref<56x128xf32, #tpu.memory_space<vmem>>) attributes {dimension_semantics = [#tpu.dimension_semantics<parallel>], iteration_bounds = array<i64: 1>, scalar_prefetch = 0 : i64, scratch_operands = 0 : i64, tpu.core_type = #tpu.core_type<tc>, window_params = [{transform_indices = @transform_0, window_bounds = array<i64: 56, 16>}, {transform_indices = @transform_1, window_bounds = array<i64: 56, 16>}, {transform_indices = @transform_2, window_bounds = array<i64: 56, 32>}, {transform_indices = @transform_3, window_bounds = array<i64: 56, 8>}, {pipeline_mode = #tpu.pipeline_mode<synchronous>, transform_indices = @transform_4, window_bounds = array<i64: 16, 128>}, {pipeline_mode = #tpu.pipeline_mode<synchronous>, transform_indices = @transform_5, window_bounds = array<i64: 16, 128>}, {pipeline_mode = #tpu.pipeline_mode<synchronous>, transform_indices = @transform_6, window_bounds = array<i64: 32, 128>}, {pipeline_mode = #tpu.pipeline_mode<synchronous>, transform_indices = @transform_7, window_bounds = array<i64: 8, 128>}, {pipeline_mode = #tpu.pipeline_mode<synchronous>, transform_indices = @transform_8, window_bounds = array<i64: 1, 128>}, {pipeline_mode = #tpu.pipeline_mode<synchronous>, transform_indices = @transform_9, window_bounds = array<i64: 128, 128>}, {pipeline_mode = #tpu.pipeline_mode<synchronous>, transform_indices = @transform_10, window_bounds = array<i64: 1, 128>}, {pipeline_mode = #tpu.pipeline_mode<synchronous>, transform_indices = @transform_11, window_bounds = array<i64: 128, 128>}, {pipeline_mode = #tpu.pipeline_mode<synchronous>, transform_indices = @transform_12, window_bounds = array<i64: 1, 128>}, {transform_indices = @transform_13, window_bounds = array<i64: 56, 128>}]} {
    %c0 = arith.constant 0 : index
    %c0_0 = arith.constant 0 : index
    %0 = vector.load %arg1[%c0, %c0_0] : memref<56x16xf32, #tpu.memory_space<vmem>>, vector<56x16xf32>
    %c0_1 = arith.constant 0 : index
    %c0_2 = arith.constant 0 : index
    %1 = vector.load %arg5[%c0_1, %c0_2] : memref<16x128xf32, #tpu.memory_space<vmem>>, vector<16x128xf32>
    %cst = arith.constant dense<0.000000e+00> : vector<56x128xf32>
    %2 = tpu.matmul %0, %1, %cst {dimension_numbers = #tpu.dot_dimension_numbers<[1], [0], [0], [1], [0, 0, 1, 1], [], []>} : vector<56x16xf32>, vector<16x128xf32>, vector<56x128xf32> -> vector<56x128xf32>
    %c0_3 = arith.constant 0 : index
    %c0_4 = arith.constant 0 : index
    %3 = vector.load %arg2[%c0_3, %c0_4] : memref<56x16xf32, #tpu.memory_space<vmem>>, vector<56x16xf32>
    %c0_5 = arith.constant 0 : index
    %c0_6 = arith.constant 0 : index
    %4 = vector.load %arg6[%c0_5, %c0_6] : memref<16x128xf32, #tpu.memory_space<vmem>>, vector<16x128xf32>
    %cst_7 = arith.constant dense<0.000000e+00> : vector<56x128xf32>
    %5 = tpu.matmul %3, %4, %cst_7 {dimension_numbers = #tpu.dot_dimension_numbers<[1], [0], [0], [1], [0, 0, 1, 1], [], []>} : vector<56x16xf32>, vector<16x128xf32>, vector<56x128xf32> -> vector<56x128xf32>
    %6 = arith.addf %2, %5 : vector<56x128xf32>
    %c0_8 = arith.constant 0 : index
    %c0_9 = arith.constant 0 : index
    %7 = vector.load %arg3[%c0_8, %c0_9] : memref<56x32xf32, #tpu.memory_space<vmem>>, vector<56x32xf32>
    %c0_10 = arith.constant 0 : index
    %c0_11 = arith.constant 0 : index
    %8 = vector.load %arg7[%c0_10, %c0_11] : memref<32x128xf32, #tpu.memory_space<vmem>>, vector<32x128xf32>
    %cst_12 = arith.constant dense<0.000000e+00> : vector<56x128xf32>
    %9 = tpu.matmul %7, %8, %cst_12 {dimension_numbers = #tpu.dot_dimension_numbers<[1], [0], [0], [1], [0, 0, 1, 1], [], []>} : vector<56x32xf32>, vector<32x128xf32>, vector<56x128xf32> -> vector<56x128xf32>
    %10 = arith.addf %6, %9 : vector<56x128xf32>
    %c0_13 = arith.constant 0 : index
    %c0_14 = arith.constant 0 : index
    %11 = vector.load %arg4[%c0_13, %c0_14] : memref<56x8xf32, #tpu.memory_space<vmem>>, vector<56x8xf32>
    %c0_15 = arith.constant 0 : index
    %c0_16 = arith.constant 0 : index
    %12 = vector.load %arg8[%c0_15, %c0_16] : memref<8x128xf32, #tpu.memory_space<vmem>>, vector<8x128xf32>
    %cst_17 = arith.constant dense<0.000000e+00> : vector<56x128xf32>
    %13 = tpu.matmul %11, %12, %cst_17 {dimension_numbers = #tpu.dot_dimension_numbers<[1], [0], [0], [1], [0, 0, 1, 1], [], []>} : vector<56x8xf32>, vector<8x128xf32>, vector<56x128xf32> -> vector<56x128xf32>
    %14 = arith.addf %10, %13 : vector<56x128xf32>
    %c0_18 = arith.constant 0 : index
    %c0_19 = arith.constant 0 : index
    %15 = vector.load %arg9[%c0_18, %c0_19] : memref<1x128xf32, #tpu.memory_space<vmem>>, vector<1x128xf32>
    %16 = vector.broadcast %15 : vector<1x128xf32> to vector<56x128xf32>
    %17 = arith.addf %14, %16 : vector<56x128xf32>
    %cst_20 = arith.constant 0.000000e+00 : f32
    %18 = vector.broadcast %cst_20 : f32 to vector<56x128xf32>
    %19 = arith.maximumf %17, %18 : vector<56x128xf32>
    %c0_21 = arith.constant 0 : index
    %c0_22 = arith.constant 0 : index
    %20 = vector.load %arg10[%c0_21, %c0_22] : memref<128x128xf32, #tpu.memory_space<vmem>>, vector<128x128xf32>
    %cst_23 = arith.constant dense<0.000000e+00> : vector<56x128xf32>
    %21 = tpu.matmul %19, %20, %cst_23 {dimension_numbers = #tpu.dot_dimension_numbers<[1], [0], [0], [1], [0, 0, 1, 1], [], []>} : vector<56x128xf32>, vector<128x128xf32>, vector<56x128xf32> -> vector<56x128xf32>
    %c0_24 = arith.constant 0 : index
    %c0_25 = arith.constant 0 : index
    %22 = vector.load %arg11[%c0_24, %c0_25] : memref<1x128xf32, #tpu.memory_space<vmem>>, vector<1x128xf32>
    %23 = vector.broadcast %22 : vector<1x128xf32> to vector<56x128xf32>
    %24 = arith.addf %21, %23 : vector<56x128xf32>
    %cst_26 = arith.constant 0.000000e+00 : f32
    %25 = vector.broadcast %cst_26 : f32 to vector<56x128xf32>
    %26 = arith.maximumf %24, %25 : vector<56x128xf32>
    %c0_27 = arith.constant 0 : index
    %c0_28 = arith.constant 0 : index
    %27 = vector.load %arg12[%c0_27, %c0_28] : memref<128x128xf32, #tpu.memory_space<vmem>>, vector<128x128xf32>
    %cst_29 = arith.constant dense<0.000000e+00> : vector<56x128xf32>
    %28 = tpu.matmul %26, %27, %cst_29 {dimension_numbers = #tpu.dot_dimension_numbers<[1], [0], [0], [1], [0, 0, 1, 1], [], []>} : vector<56x128xf32>, vector<128x128xf32>, vector<56x128xf32> -> vector<56x128xf32>
    %c0_30 = arith.constant 0 : index
    %c0_31 = arith.constant 0 : index
    %29 = vector.load %arg13[%c0_30, %c0_31] : memref<1x128xf32, #tpu.memory_space<vmem>>, vector<1x128xf32>
    %30 = vector.broadcast %29 : vector<1x128xf32> to vector<56x128xf32>
    %31 = arith.addf %28, %30 : vector<56x128xf32>
    %cst_32 = arith.constant 0.000000e+00 : f32
    %32 = vector.broadcast %cst_32 : f32 to vector<56x128xf32>
    %33 = arith.maximumf %31, %32 : vector<56x128xf32>
    %c0_33 = arith.constant 0 : index
    %c0_34 = arith.constant 0 : index
    %34 = vector.load %arg14[%c0_33, %c0_34] : memref<56x128xf32, #tpu.memory_space<vmem>>, vector<56x128xf32>
    tpu.vector_store %arg14[%c0_33, %c0_34], %33 {strides = array<i32>} : memref<56x128xf32, #tpu.memory_space<vmem>>, vector<56x128xf32>,
    return
  }
  func.func @transform_0(%arg0: i32) -> (i32, i32) {
    %c0_i32 = arith.constant 0 : i32
    %c0_i32_0 = arith.constant 0 : i32
    return %arg0, %c0_i32 : i32, i32
  }
  func.func @transform_1(%arg0: i32) -> (i32, i32) {
    %c0_i32 = arith.constant 0 : i32
    %c0_i32_0 = arith.constant 0 : i32
    return %arg0, %c0_i32 : i32, i32
  }
  func.func @transform_2(%arg0: i32) -> (i32, i32) {
    %c0_i32 = arith.constant 0 : i32
    %c0_i32_0 = arith.constant 0 : i32
    return %arg0, %c0_i32 : i32, i32
  }
  func.func @transform_3(%arg0: i32) -> (i32, i32) {
    %c0_i32 = arith.constant 0 : i32
    %c0_i32_0 = arith.constant 0 : i32
    return %arg0, %c0_i32 : i32, i32
  }
  func.func @transform_4(%arg0: i32) -> (i32, i32) {
    %c0_i32 = arith.constant 0 : i32
    %c0_i32_0 = arith.constant 0 : i32
    %c0_i32_1 = arith.constant 0 : i32
    return %c0_i32, %c0_i32_0 : i32, i32
  }
  func.func @transform_5(%arg0: i32) -> (i32, i32) {
    %c0_i32 = arith.constant 0 : i32
    %c0_i32_0 = arith.constant 0 : i32
    %c0_i32_1 = arith.constant 0 : i32
    return %c0_i32, %c0_i32_0 : i32, i32
  }
  func.func @transform_6(%arg0: i32) -> (i32, i32) {
    %c0_i32 = arith.constant 0 : i32
    %c0_i32_0 = arith.constant 0 : i32
    %c0_i32_1 = arith.constant 0 : i32
    return %c0_i32, %c0_i32_0 : i32, i32
  }
  func.func @transform_7(%arg0: i32) -> (i32, i32) {
    %c0_i32 = arith.constant 0 : i32
    %c0_i32_0 = arith.constant 0 : i32
    %c0_i32_1 = arith.constant 0 : i32
    return %c0_i32, %c0_i32_0 : i32, i32
  }
  func.func @transform_8(%arg0: i32) -> (i32, i32) {
    %c0_i32 = arith.constant 0 : i32
    %c0_i32_0 = arith.constant 0 : i32
    %c0_i32_1 = arith.constant 0 : i32
    return %c0_i32, %c0_i32_0 : i32, i32
  }
  func.func @transform_9(%arg0: i32) -> (i32, i32) {
    %c0_i32 = arith.constant 0 : i32
    %c0_i32_0 = arith.constant 0 : i32
    %c0_i32_1 = arith.constant 0 : i32
    return %c0_i32, %c0_i32_0 : i32, i32
  }
  func.func @transform_10(%arg0: i32) -> (i32, i32) {
    %c0_i32 = arith.constant 0 : i32
    %c0_i32_0 = arith.constant 0 : i32
    %c0_i32_1 = arith.constant 0 : i32
    return %c0_i32, %c0_i32_0 : i32, i32
  }
  func.func @transform_11(%arg0: i32) -> (i32, i32) {
    %c0_i32 = arith.constant 0 : i32
    %c0_i32_0 = arith.constant 0 : i32
    %c0_i32_1 = arith.constant 0 : i32
    return %c0_i32, %c0_i32_0 : i32, i32
  }
  func.func @transform_12(%arg0: i32) -> (i32, i32) {
    %c0_i32 = arith.constant 0 : i32
    %c0_i32_0 = arith.constant 0 : i32
    %c0_i32_1 = arith.constant 0 : i32
    return %c0_i32, %c0_i32_0 : i32, i32
  }
  func.func @transform_13(%arg0: i32) -> (i32, i32) {
    %c0_i32 = arith.constant 0 : i32
    %c0_i32_0 = arith.constant 0 : i32
    return %arg0, %c0_i32 : i32, i32
  }
}

</mosaic_0001>

<llo_original>
// kernel: tpu_custom_call.1
$region0: #{tpu_custom_call.1}
  #allocation0 [shape = 'u32[]', space=smem, size = 0x4, offset = 0x4, fixed_abs, tag = 'smem constant byte address 0x4 - core index']
  #allocation1 [shape = 'u32[144,128]{1,0:T(1,128)}', space=vmem, size = 0x12000, scoped, tag = 'internal scratch']
  %s0 = inlined_call_operand.vmem [shape: f32[56,16], index: 0, kind: input, shape index: {}]
  %s1 = inlined_call_operand.vmem [shape: f32[56,16], index: 1, kind: input, shape index: {}]
  %s2 = inlined_call_operand.vmem [shape: f32[56,32], index: 2, kind: input, shape index: {}]
  %s3 = inlined_call_operand.vmem [shape: f32[56,8], index: 3, kind: input, shape index: {}]
  %s4 = inlined_call_operand.hbm [shape: f32[16,128], index: 4, kind: input, shape index: {}]
  %s5 = inlined_call_operand.hbm [shape: f32[16,128], index: 5, kind: input, shape index: {}]
  %s6 = inlined_call_operand.hbm [shape: f32[32,128], index: 6, kind: input, shape index: {}]
  %s7 = inlined_call_operand.vmem [shape: f32[8,128], index: 7, kind: input, shape index: {}]
  %s8 = inlined_call_operand.vmem [shape: f32[1,128], index: 8, kind: input, shape index: {}]
  %s9 = inlined_call_operand.vmem [shape: f32[128,128], index: 9, kind: input, shape index: {}]
  %s10 = inlined_call_operand.vmem [shape: f32[1,128], index: 10, kind: input, shape index: {}]
  %s11 = inlined_call_operand.vmem [shape: f32[128,128], index: 11, kind: input, shape index: {}]
  %s12 = inlined_call_operand.vmem [shape: f32[1,128], index: 12, kind: input, shape index: {}]
  %s13 = inlined_call_operand.hbm [shape: f32[56,128], index: 13, kind: output, shape index: {}]
  %s14 = sld [smem:[#allocation0]]
  $region74: #{tpu_custom_call.1} parent=0
    _
  %s16 = ssub.s32 1, %s14
  %s17 = scalar_select 0, %s16, %s14
  $region1: #{tpu_custom_call.1} parent=0
    #allocation2 [shape = 'u8[8192]{0}', space=vmem, size = 0x2000, scoped, tag = 'input window, operand 4, single buffered']
    #allocation3 [shape = 's32[1]{0}', space=sflag, size = 0x4, scoped, tag = 'scoped memory for tpu_custom_call.1']
    #allocation4 [shape = 's32[1]{0}', space=sflag, size = 0x4, scoped, tag = 'scoped memory for tpu_custom_call.1']
    #allocation5 [shape = 'u8[8192]{0}', space=vmem, size = 0x2000, scoped, tag = 'input window, operand 5, single buffered']
    #allocation6 [shape = 's32[1]{0}', space=sflag, size = 0x4, scoped, tag = 'scoped memory for tpu_custom_call.1']
    #allocation7 [shape = 'u8[16384]{0}', space=vmem, size = 0x4000, scoped, tag = 'input window, operand 6, single buffered']
    #allocation8 [shape = 'u8[28672]{0}', space=vmem, size = 0x7000, scoped, tag = 'output window, operand 0, single buffered']
    %18 = vsyncpa [#allocation3], 0
    %19 = vsyncpa [#allocation6], 0
    %20 = vsyncpa [#allocation4], 0
    // Predicated region
    $region2: #{tpu_custom_call.1} parent=1 // pred_check
      _
    $region3: #{tpu_custom_call.1} parent=1 // pred_check_branch
      %22 = sbr.rel (0) target = $region5
    $region4: #{tpu_custom_call.1} parent=1 // pred_region
      _
    $region5: #{tpu_custom_call.1} parent=1 // pred_fallthru
      _
    // Predicated region
    $region6: #{tpu_custom_call.1} parent=1 // pred_check
      _
    $region7: #{tpu_custom_call.1} parent=1 // pred_check_branch
      %24 = sbr.rel (0) target = $region9
    $region8: #{tpu_custom_call.1} parent=1 // pred_region
      _
    $region9: #{tpu_custom_call.1} parent=1 // pred_fallthru
      _
    // Predicated region
    $region10: #{tpu_custom_call.1} parent=1 // pred_check
      _
    $region11: #{tpu_custom_call.1} parent=1 // pred_check_branch
      %26 = sbr.rel (0) target = $region13
    $region12: #{tpu_custom_call.1} parent=1 // pred_region
      _
    $region13: #{tpu_custom_call.1} parent=1 // pred_fallthru
      _
    // Predicated region
    $region14: #{tpu_custom_call.1} parent=1 // pred_check
      _
    $region15: #{tpu_custom_call.1} parent=1 // pred_check_branch
      %28 = sbr.rel (0) target = $region17
    $region16: #{tpu_custom_call.1} parent=1 // pred_region
      _
    $region17: #{tpu_custom_call.1} parent=1 // pred_fallthru
      _
    // Predicated region
    $region18: #{tpu_custom_call.1} parent=1 // pred_check
      _
    $region19: #{tpu_custom_call.1} parent=1 // pred_check_branch
      %30 = sbr.rel (0) target = $region21
    $region20: #{tpu_custom_call.1} parent=1 // pred_region
      %s32 = ssub.s32 256, 256
      %33 = vsyncadd [#allocation3], %s32
      %s34 = sshll.u32 [#allocation2], 4
      %s35 = int_to_ptr.vmem [resolvable:$true] %s34
      %40 = dma.hbm_to_vmem [thread:$0]  %s4, 256, %s35, [#allocation3], 128, 128, 8
    $region21: #{tpu_custom_call.1} parent=1 // pred_fallthru
      _
    // Predicated region
    $region22: #{tpu_custom_call.1} parent=1 // pred_check
      _
    $region23: #{tpu_custom_call.1} parent=1 // pred_check_branch
      %42 = sbr.rel (0) target = $region25
    $region24: #{tpu_custom_call.1} parent=1 // pred_region
      %s44 = ssub.s32 256, 256
      %45 = vsyncadd [#allocation6], %s44
      %s46 = sshll.u32 [#allocation5], 4
      %s47 = int_to_ptr.vmem [resolvable:$true] %s46
      %52 = dma.hbm_to_vmem [thread:$0]  %s5, 256, %s47, [#allocation6], 128, 128, 8
    $region25: #{tpu_custom_call.1} parent=1 // pred_fallthru
      _
    // Predicated region
    $region26: #{tpu_custom_call.1} parent=1 // pred_check
      _
    $region27: #{tpu_custom_call.1} parent=1 // pred_check_branch
      %54 = sbr.rel (0) target = $region29
    $region28: #{tpu_custom_call.1} parent=1 // pred_region
      %s56 = ssub.s32 512, 512
      %57 = vsyncadd [#allocation6], %s56
      %s58 = sshll.u32 [#allocation7], 4
      %s59 = int_to_ptr.vmem [resolvable:$true] %s58
      %64 = dma.hbm_to_vmem [thread:$0]  %s6, 512, %s59, [#allocation6], 128, 128, 8
    $region29: #{tpu_custom_call.1} parent=1 // pred_fallthru
      _
    // Predicated region
    $region30: #{tpu_custom_call.1} parent=1 // pred_check
      _
    $region31: #{tpu_custom_call.1} parent=1 // pred_check_branch
      %66 = sbr.rel (0) target = $region33
    $region32: #{tpu_custom_call.1} parent=1 // pred_region
      _
    $region33: #{tpu_custom_call.1} parent=1 // pred_fallthru
      _
    // Predicated region
    $region34: #{tpu_custom_call.1} parent=1 // pred_check
      _
    $region35: #{tpu_custom_call.1} parent=1 // pred_check_branch
      %68 = sbr.rel (0) target = $region37
    $region36: #{tpu_custom_call.1} parent=1 // pred_region
      _
    $region37: #{tpu_custom_call.1} parent=1 // pred_fallthru
      _
    // Predicated region
    $region38: #{tpu_custom_call.1} parent=1 // pred_check
      _
    $region39: #{tpu_custom_call.1} parent=1 // pred_check_branch
      %70 = sbr.rel (0) target = $region41
    $region40: #{tpu_custom_call.1} parent=1 // pred_region
      _
    $region41: #{tpu_custom_call.1} parent=1 // pred_fallthru
      _
    // Predicated region
    $region42: #{tpu_custom_call.1} parent=1 // pred_check
      _
    $region43: #{tpu_custom_call.1} parent=1 // pred_check_branch
      %72 = sbr.rel (0) target = $region45
    $region44: #{tpu_custom_call.1} parent=1 // pred_region
      _
    $region45: #{tpu_custom_call.1} parent=1 // pred_fallthru
      _
    // Predicated region
    $region46: #{tpu_custom_call.1} parent=1 // pred_check
      _
    $region47: #{tpu_custom_call.1} parent=1 // pred_check_branch
      %74 = sbr.rel (0) target = $region49
    $region48: #{tpu_custom_call.1} parent=1 // pred_region
      _
    $region49: #{tpu_custom_call.1} parent=1 // pred_fallthru
      _
    // Predicated region
    $region50: #{tpu_custom_call.1} parent=1 // pred_check
      _
    $region51: #{tpu_custom_call.1} parent=1 // pred_check_branch
      %76 = sbr.rel (0) target = $region53
    $region52: #{tpu_custom_call.1} parent=1 // pred_region
      _
    $region53: #{tpu_custom_call.1} parent=1 // pred_fallthru
      _
    // Predicated region
    $region54: #{tpu_custom_call.1} parent=1 // pred_check
      _
    $region55: #{tpu_custom_call.1} parent=1 // pred_check_branch
      %78 = sbr.rel (0) target = $region57
    $region56: #{tpu_custom_call.1} parent=1 // pred_region
      %79 = dma.done [#allocation3], 256
    $region57: #{tpu_custom_call.1} parent=1 // pred_fallthru
      _
    // Predicated region
    $region58: #{tpu_custom_call.1} parent=1 // pred_check
      _
    $region59: #{tpu_custom_call.1} parent=1 // pred_check_branch
      %81 = sbr.rel (0) target = $region61
    $region60: #{tpu_custom_call.1} parent=1 // pred_region
      %82 = dma.done [#allocation6], 256
    $region61: #{tpu_custom_call.1} parent=1 // pred_fallthru
      _
    // Predicated region
    $region62: #{tpu_custom_call.1} parent=1 // pred_check
      _
    $region63: #{tpu_custom_call.1} parent=1 // pred_check_branch
      %84 = sbr.rel (0) target = $region65
    $region64: #{tpu_custom_call.1} parent=1 // pred_region
      %85 = dma.done [#allocation6], 512
    $region65: #{tpu_custom_call.1} parent=1 // pred_fallthru
      _
    %v86 = vld [vmem:[%s0] sm:$0xff]
    %v87 = vld [vmem:[%s0 + $0x8] sm:$0xff]
    %v88 = vld [vmem:[%s0 + $0x10] sm:$0xff]
    %v89 = vld [vmem:[%s0 + $0x18] sm:$0xff]
    %v90 = vld [vmem:[%s0 + $0x20] sm:$0xff]
    %v91 = vld [vmem:[%s0 + $0x28] sm:$0xff]
    %v92 = vld [vmem:[%s0 + $0x30] sm:$0xff]
    %v93 = vld [vmem:[#allocation2] sm:$0xff]
    %v94 = vld [vmem:[#allocation2 + $0x8] sm:$0xff]
    %v95 = vld [vmem:[%s1] sm:$0xff]
    %v96 = vld [vmem:[%s1 + $0x8] sm:$0xff]
    %v97 = vld [vmem:[%s1 + $0x10] sm:$0xff]
    %v98 = vld [vmem:[%s1 + $0x18] sm:$0xff]
    %v99 = vld [vmem:[%s1 + $0x20] sm:$0xff]
    %v100 = vld [vmem:[%s1 + $0x28] sm:$0xff]
    %v101 = vld [vmem:[%s1 + $0x30] sm:$0xff]
    %v102 = vld [vmem:[#allocation5] sm:$0xff]
    %v103 = vld [vmem:[#allocation5 + $0x8] sm:$0xff]
    %vm104 = vcmask 130048
    %v106 = vsel %vm104, %v95, 0
    %v109 = vsel %vm104, %v96, 0
    %v112 = vsel %vm104, %v97, 0
    %v115 = vsel %vm104, %v98, 0
    %v118 = vsel %vm104, %v99, 0
    %v121 = vsel %vm104, %v100, 0
    %v124 = vsel %vm104, %v101, 0
    %126 = vmatprep.subr.mxu0 0.0
    %127 = vmatpush1.msra.mxu0 0.0
    %128 = vmatprep.subr.mxu0 0.0
    %129 = vmatpush1.msra.mxu0 0.0
    %130 = vmatprep.subr.mxu0 0.0
    %131 = vmatpush1.msra.mxu0 0.0
    %132 = vmatprep.subr.mxu0 0.0
    %133 = vmatpush1.msra.mxu0 0.0
    %134 = vmatprep.subr.mxu0 0.0
    %135 = vmatpush1.msra.mxu0 0.0
    %136 = vmatprep.subr.mxu0 0.0
    %137 = vmatpush1.msra.mxu0 0.0
    %138 = vmatprep.subr.mxu0 0.0
    %139 = vmatpush1.msra.mxu0 0.0
    %140 = vmatprep.subr.mxu0 0.0
    %141 = vmatpush1.msra.mxu0 0.0
    %142 = vmatprep.subr.mxu0 0.0
    %143 = vmatpush1.msra.mxu0 0.0
    %144 = vmatprep.subr.mxu0 0.0
    %145 = vmatpush1.msra.mxu0 0.0
    %146 = vmatprep.subr.mxu0 0.0
    %147 = vmatpush1.msra.mxu0 0.0
    %148 = vmatprep.subr.mxu0 0.0
    %149 = vmatpush1.msra.mxu0 0.0
    %150 = vmatprep.subr.mxu0 0.0
    %151 = vmatpush1.msra.mxu0 0.0
    %152 = vmatprep.subr.mxu0 0.0
    %153 = vmatpush1.msra.mxu0 0.0
    %154 = vmatprep.subr.mxu0 0.0
    %155 = vmatpush1.msra.mxu0 %v103
    %156 = vmatprep.subr.mxu0 0.0
    %157 = vmatpush1.msra.mxu0 %v102
    %158 = vmatprep.subr.mxu0 0.0
    %159 = vmatpush2.msra.mxu0 0.0
    %160 = vmatprep.subr.mxu0 0.0
    %161 = vmatpush2.msra.mxu0 0.0
    %162 = vmatprep.subr.mxu0 0.0
    %163 = vmatpush2.msra.mxu0 0.0
    %164 = vmatprep.subr.mxu0 0.0
    %165 = vmatpush2.msra.mxu0 0.0
    %166 = vmatprep.subr.mxu0 0.0
    %167 = vmatpush2.msra.mxu0 0.0
    %168 = vmatprep.subr.mxu0 0.0
    %169 = vmatpush2.msra.mxu0 0.0
    %170 = vmatprep.subr.mxu0 0.0
    %171 = vmatpush2.msra.mxu0 0.0
    %172 = vmatprep.subr.mxu0 0.0
    %173 = vmatpush2.msra.mxu0 0.0
    %174 = vmatprep.subr.mxu0 0.0
    %175 = vmatpush2.msra.mxu0 0.0
    %176 = vmatprep.subr.mxu0 0.0
    %177 = vmatpush2.msra.mxu0 0.0
    %178 = vmatprep.subr.mxu0 0.0
    %179 = vmatpush2.msra.mxu0 0.0
    %180 = vmatprep.subr.mxu0 0.0
    %181 = vmatpush2.msra.mxu0 0.0
    %182 = vmatprep.subr.mxu0 0.0
    %183 = vmatpush2.msra.mxu0 0.0
    %184 = vmatprep.subr.mxu0 0.0
    %185 = vmatpush2.msra.mxu0 0.0
    %186 = vmatprep.subr.mxu0 0.0
    %187 = vmatpush2.msra.mxu0 0.0
    %188 = vmatprep.subr.mxu0 0.0
    %189 = vmatpush2.msra.mxu0 0.0
    %190 = vmatprep.mubr.f32.mxu0 0.0
    %191 = vmatmul.mubr.f32.gmra.mxu0 %v106
    %v192 = vpop.f32.mrf.mxu0
    %v193 = vadd.f32 0.0, %v192
    %v194 = vpop.f32.mrf.mxu0
    %195 = vmatprep.mubr.f32.mxu0 0.0
    %196 = vmatmul.mubr.f32.gmra.mxu0 %v109
    %v197 = vpop.f32.mrf.mxu0
    %v198 = vadd.f32 0.0, %v197
    %v199 = vpop.f32.mrf.mxu0
    %200 = vmatprep.mubr.f32.mxu0 0.0
    %201 = vmatmul.mubr.f32.gmra.mxu0 %v112
    %v202 = vpop.f32.mrf.mxu0
    %v203 = vadd.f32 0.0, %v202
    %v204 = vpop.f32.mrf.mxu0
    %205 = vmatprep.mubr.f32.mxu0 0.0
    %206 = vmatmul.mubr.f32.gmra.mxu0 %v115
    %v207 = vpop.f32.mrf.mxu0
    %v208 = vadd.f32 0.0, %v207
    %v209 = vpop.f32.mrf.mxu0
    %210 = vmatprep.mubr.f32.mxu0 0.0
    %211 = vmatmul.mubr.f32.gmra.mxu0 %v118
    %v212 = vpop.f32.mrf.mxu0
    %v213 = vadd.f32 0.0, %v212
    %v214 = vpop.f32.mrf.mxu0
    %215 = vmatprep.mubr.f32.mxu0 0.0
    %216 = vmatmul.mubr.f32.gmra.mxu0 %v121
    %v217 = vpop.f32.mrf.mxu0
    %v218 = vadd.f32 0.0, %v217
    %v219 = vpop.f32.mrf.mxu0
    %220 = vmatprep.mubr.f32.mxu0 0.0
    %221 = vmatmul.mubr.f32.gmra.mxu0 %v124
    %v222 = vpop.f32.mrf.mxu0
    %v223 = vadd.f32 0.0, %v222
    %v224 = vpop.f32.mrf.mxu0
    %225 = vdwg.mxu0
    %v227 = vsel %vm104, %v86, 0
    %v230 = vsel %vm104, %v87, 0
    %v233 = vsel %vm104, %v88, 0
    %v236 = vsel %vm104, %v89, 0
    %v239 = vsel %vm104, %v90, 0
    %v242 = vsel %vm104, %v91, 0
    %v245 = vsel %vm104, %v92, 0
    %247 = vmatprep.subr.mxu0 0.0
    %248 = vmatpush1.msra.mxu0 0.0
    %249 = vmatprep.subr.mxu0 0.0
    %250 = vmatpush1.msra.mxu0 0.0
    %251 = vmatprep.subr.mxu0 0.0
    %252 = vmatpush1.msra.mxu0 0.0
    %253 = vmatprep.subr.mxu0 0.0
    %254 = vmatpush1.msra.mxu0 0.0
    %255 = vmatprep.subr.mxu0 0.0
    %256 = vmatpush1.msra.mxu0 0.0
    %257 = vmatprep.subr.mxu0 0.0
    %258 = vmatpush1.msra.mxu0 0.0
    %259 = vmatprep.subr.mxu0 0.0
    %260 = vmatpush1.msra.mxu0 0.0
    %261 = vmatprep.subr.mxu0 0.0
    %262 = vmatpush1.msra.mxu0 0.0
    %263 = vmatprep.subr.mxu0 0.0
    %264 = vmatpush1.msra.mxu0 0.0
    %265 = vmatprep.subr.mxu0 0.0
    %266 = vmatpush1.msra.mxu0 0.0
    %267 = vmatprep.subr.mxu0 0.0
    %268 = vmatpush1.msra.mxu0 0.0
    %269 = vmatprep.subr.mxu0 0.0
    %270 = vmatpush1.msra.mxu0 0.0
    %271 = vmatprep.subr.mxu0 0.0
    %272 = vmatpush1.msra.mxu0 0.0
    %273 = vmatprep.subr.mxu0 0.0
    %274 = vmatpush1.msra.mxu0 0.0
    %275 = vmatprep.subr.mxu0 0.0
    %276 = vmatpush1.msra.mxu0 %v94
    %277 = vmatprep.subr.mxu0 0.0
    %278 = vmatpush1.msra.mxu0 %v93
    %279 = vmatprep.subr.mxu0 0.0
    %280 = vmatpush2.msra.mxu0 0.0
    %281 = vmatprep.subr.mxu0 0.0
    %282 = vmatpush2.msra.mxu0 0.0
    %283 = vmatprep.subr.mxu0 0.0
    %284 = vmatpush2.msra.mxu0 0.0
    %285 = vmatprep.subr.mxu0 0.0
    %286 = vmatpush2.msra.mxu0 0.0
    %287 = vmatprep.subr.mxu0 0.0
    %288 = vmatpush2.msra.mxu0 0.0
    %289 = vmatprep.subr.mxu0 0.0
    %290 = vmatpush2.msra.mxu0 0.0
    %291 = vmatprep.subr.mxu0 0.0
    %292 = vmatpush2.msra.mxu0 0.0
    %293 = vmatprep.subr.mxu0 0.0
    %294 = vmatpush2.msra.mxu0 0.0
    %295 = vmatprep.subr.mxu0 0.0
    %296 = vmatpush2.msra.mxu0 0.0
    %297 = vmatprep.subr.mxu0 0.0
    %298 = vmatpush2.msra.mxu0 0.0
    %299 = vmatprep.subr.mxu0 0.0
    %300 = vmatpush2.msra.mxu0 0.0
    %301 = vmatprep.subr.mxu0 0.0
    %302 = vmatpush2.msra.mxu0 0.0
    %303 = vmatprep.subr.mxu0 0.0
    %304 = vmatpush2.msra.mxu0 0.0
    %305 = vmatprep.subr.mxu0 0.0
    %306 = vmatpush2.msra.mxu0 0.0
    %307 = vmatprep.subr.mxu0 0.0
    %308 = vmatpush2.msra.mxu0 0.0
    %309 = vmatprep.subr.mxu0 0.0
    %310 = vmatpush2.msra.mxu0 0.0
    %311 = vmatprep.mubr.f32.mxu0 0.0
    %312 = vmatmul.mubr.f32.gmra.mxu0 %v227
    %v313 = vpop.f32.mrf.mxu0
    %v314 = vadd.f32 %v193, %v313
    %v315 = vpop.f32.mrf.mxu0
    %316 = vmatprep.mubr.f32.mxu0 0.0
    %317 = vmatmul.mubr.f32.gmra.mxu0 %v230
    %v318 = vpop.f32.mrf.mxu0
    %v319 = vadd.f32 %v198, %v318
    %v320 = vpop.f32.mrf.mxu0
    %321 = vmatprep.mubr.f32.mxu0 0.0
    %322 = vmatmul.mubr.f32.gmra.mxu0 %v233
    %v323 = vpop.f32.mrf.mxu0
    %v324 = vadd.f32 %v203, %v323
    %v325 = vpop.f32.mrf.mxu0
    %326 = vmatprep.mubr.f32.mxu0 0.0
    %327 = vmatmul.mubr.f32.gmra.mxu0 %v236
    %v328 = vpop.f32.mrf.mxu0
    %v329 = vadd.f32 %v208, %v328
    %v330 = vpop.f32.mrf.mxu0
    %331 = vmatprep.mubr.f32.mxu0 0.0
    %332 = vmatmul.mubr.f32.gmra.mxu0 %v239
    %v333 = vpop.f32.mrf.mxu0
    %v334 = vadd.f32 %v213, %v333
    %v335 = vpop.f32.mrf.mxu0
    %336 = vmatprep.mubr.f32.mxu0 0.0
    %337 = vmatmul.mubr.f32.gmra.mxu0 %v242
    %v338 = vpop.f32.mrf.mxu0
    %v339 = vadd.f32 %v218, %v338
    %v340 = vpop.f32.mrf.mxu0
    %341 = vmatprep.mubr.f32.mxu0 0.0
    %342 = vmatmul.mubr.f32.gmra.mxu0 %v245
    %v343 = vpop.f32.mrf.mxu0
    %v344 = vadd.f32 %v223, %v343
    %v345 = vpop.f32.mrf.mxu0
    %346 = vdwg.mxu0
    %v347 = vld [vmem:[%s2] sm:$0xff]
    %v348 = vld [vmem:[%s2 + $0x8] sm:$0xff]
    %v349 = vld [vmem:[%s2 + $0x10] sm:$0xff]
    %v350 = vld [vmem:[%s2 + $0x18] sm:$0xff]
    %v351 = vld [vmem:[%s2 + $0x20] sm:$0xff]
    %v352 = vld [vmem:[%s2 + $0x28] sm:$0xff]
    %v353 = vld [vmem:[%s2 + $0x30] sm:$0xff]
    %v354 = vld [vmem:[#allocation7] sm:$0xff]
    %v355 = vld [vmem:[#allocation7 + $0x8] sm:$0xff]
    %v356 = vld [vmem:[#allocation7 + $0x10] sm:$0xff]
    %v357 = vld [vmem:[#allocation7 + $0x18] sm:$0xff]
    %vm358 = vcmask 261120
    %v360 = vsel %vm358, %v347, 0
    %v363 = vsel %vm358, %v348, 0
    %v366 = vsel %vm358, %v349, 0
    %v369 = vsel %vm358, %v350, 0
    %v372 = vsel %vm358, %v351, 0
    %v375 = vsel %vm358, %v352, 0
    %v378 = vsel %vm358, %v353, 0
    %380 = vmatprep.subr.mxu0 0.0
    %381 = vmatpush1.msra.mxu0 0.0
    %382 = vmatprep.subr.mxu0 0.0
    %383 = vmatpush1.msra.mxu0 0.0
    %384 = vmatprep.subr.mxu0 0.0
    %385 = vmatpush1.msra.mxu0 0.0
    %386 = vmatprep.subr.mxu0 0.0
    %387 = vmatpush1.msra.mxu0 0.0
    %388 = vmatprep.subr.mxu0 0.0
    %389 = vmatpush1.msra.mxu0 0.0
    %390 = vmatprep.subr.mxu0 0.0
    %391 = vmatpush1.msra.mxu0 0.0
    %392 = vmatprep.subr.mxu0 0.0
    %393 = vmatpush1.msra.mxu0 0.0
    %394 = vmatprep.subr.mxu0 0.0
    %395 = vmatpush1.msra.mxu0 0.0
    %396 = vmatprep.subr.mxu0 0.0
    %397 = vmatpush1.msra.mxu0 0.0
    %398 = vmatprep.subr.mxu0 0.0
    %399 = vmatpush1.msra.mxu0 0.0
    %400 = vmatprep.subr.mxu0 0.0
    %401 = vmatpush1.msra.mxu0 0.0
    %402 = vmatprep.subr.mxu0 0.0
    %403 = vmatpush1.msra.mxu0 0.0
    %404 = vmatprep.subr.mxu0 0.0
    %405 = vmatpush1.msra.mxu0 %v357
    %406 = vmatprep.subr.mxu0 0.0
    %407 = vmatpush1.msra.mxu0 %v356
    %408 = vmatprep.subr.mxu0 0.0
    %409 = vmatpush1.msra.mxu0 %v355
    %410 = vmatprep.subr.mxu0 0.0
    %411 = vmatpush1.msra.mxu0 %v354
    %412 = vmatprep.subr.mxu0 0.0
    %413 = vmatpush2.msra.mxu0 0.0
    %414 = vmatprep.subr.mxu0 0.0
    %415 = vmatpush2.msra.mxu0 0.0
    %416 = vmatprep.subr.mxu0 0.0
    %417 = vmatpush2.msra.mxu0 0.0
    %418 = vmatprep.subr.mxu0 0.0
    %419 = vmatpush2.msra.mxu0 0.0
    %420 = vmatprep.subr.mxu0 0.0
    %421 = vmatpush2.msra.mxu0 0.0
    %422 = vmatprep.subr.mxu0 0.0
    %423 = vmatpush2.msra.mxu0 0.0
    %424 = vmatprep.subr.mxu0 0.0
    %425 = vmatpush2.msra.mxu0 0.0
    %426 = vmatprep.subr.mxu0 0.0
    %427 = vmatpush2.msra.mxu0 0.0
    %428 = vmatprep.subr.mxu0 0.0
    %429 = vmatpush2.msra.mxu0 0.0
    %430 = vmatprep.subr.mxu0 0.0
    %431 = vmatpush2.msra.mxu0 0.0
    %432 = vmatprep.subr.mxu0 0.0
    %433 = vmatpush2.msra.mxu0 0.0
    %434 = vmatprep.subr.mxu0 0.0
    %435 = vmatpush2.msra.mxu0 0.0
    %436 = vmatprep.subr.mxu0 0.0
    %437 = vmatpush2.msra.mxu0 0.0
    %438 = vmatprep.subr.mxu0 0.0
    %439 = vmatpush2.msra.mxu0 0.0
    %440 = vmatprep.subr.mxu0 0.0
    %441 = vmatpush2.msra.mxu0 0.0
    %442 = vmatprep.subr.mxu0 0.0
    %443 = vmatpush2.msra.mxu0 0.0
    %444 = vmatprep.mubr.f32.mxu0 0.0
    %445 = vmatmul.mubr.f32.gmra.mxu0 %v360
    %v446 = vpop.f32.mrf.mxu0
    %v447 = vadd.f32 0.0, %v446
    %v448 = vpop.f32.mrf.mxu0
    %449 = vmatprep.mubr.f32.mxu0 0.0
    %450 = vmatmul.mubr.f32.gmra.mxu0 %v363
    %v451 = vpop.f32.mrf.mxu0
    %v452 = vadd.f32 0.0, %v451
    %v453 = vpop.f32.mrf.mxu0
    %454 = vmatprep.mubr.f32.mxu0 0.0
    %455 = vmatmul.mubr.f32.gmra.mxu0 %v366
    %v456 = vpop.f32.mrf.mxu0
    %v457 = vadd.f32 0.0, %v456
    %v458 = vpop.f32.mrf.mxu0
    %459 = vmatprep.mubr.f32.mxu0 0.0
    %460 = vmatmul.mubr.f32.gmra.mxu0 %v369
    %v461 = vpop.f32.mrf.mxu0
    %v462 = vadd.f32 0.0, %v461
    %v463 = vpop.f32.mrf.mxu0
    %464 = vmatprep.mubr.f32.mxu0 0.0
    %465 = vmatmul.mubr.f32.gmra.mxu0 %v372
    %v466 = vpop.f32.mrf.mxu0
    %v467 = vadd.f32 0.0, %v466
    %v468 = vpop.f32.mrf.mxu0
    %469 = vmatprep.mubr.f32.mxu0 0.0
    %470 = vmatmul.mubr.f32.gmra.mxu0 %v375
    %v471 = vpop.f32.mrf.mxu0
    %v472 = vadd.f32 0.0, %v471
    %v473 = vpop.f32.mrf.mxu0
    %474 = vmatprep.mubr.f32.mxu0 0.0
    %475 = vmatmul.mubr.f32.gmra.mxu0 %v378
    %v476 = vpop.f32.mrf.mxu0
    %v477 = vadd.f32 0.0, %v476
    %v478 = vpop.f32.mrf.mxu0
    %479 = vdwg.mxu0
    %v480 = vadd.f32 %v314, %v447
    %v481 = vadd.f32 %v319, %v452
    %v482 = vadd.f32 %v324, %v457
    %v483 = vadd.f32 %v329, %v462
    %v484 = vadd.f32 %v334, %v467
    %v485 = vadd.f32 %v339, %v472
    %v486 = vadd.f32 %v344, %v477
    %v487 = vld [vmem:[%s3] sm:$0xff]
    %v488 = vld [vmem:[%s3 + $0x8] sm:$0xff]
    %v489 = vld [vmem:[%s3 + $0x10] sm:$0xff]
    %v490 = vld [vmem:[%s3 + $0x18] sm:$0xff]
    %v491 = vld [vmem:[%s3 + $0x20] sm:$0xff]
    %v492 = vld [vmem:[%s3 + $0x28] sm:$0xff]
    %v493 = vld [vmem:[%s3 + $0x30] sm:$0xff]
    %v494 = vld [vmem:[%s7] sm:$0xff]
    %vm495 = vcmask 64512
    %v497 = vsel %vm495, %v487, 0
    %v500 = vsel %vm495, %v488, 0
    %v503 = vsel %vm495, %v489, 0
    %v506 = vsel %vm495, %v490, 0
    %v509 = vsel %vm495, %v491, 0
    %v512 = vsel %vm495, %v492, 0
    %v515 = vsel %vm495, %v493, 0
    %517 = vmatprep.subr.mxu0 0.0
    %518 = vmatpush1.msra.mxu0 0.0
    %519 = vmatprep.subr.mxu0 0.0
    %520 = vmatpush1.msra.mxu0 0.0
    %521 = vmatprep.subr.mxu0 0.0
    %522 = vmatpush1.msra.mxu0 0.0
    %523 = vmatprep.subr.mxu0 0.0
    %524 = vmatpush1.msra.mxu0 0.0
    %525 = vmatprep.subr.mxu0 0.0
    %526 = vmatpush1.msra.mxu0 0.0
    %527 = vmatprep.subr.mxu0 0.0
    %528 = vmatpush1.msra.mxu0 0.0
    %529 = vmatprep.subr.mxu0 0.0
    %530 = vmatpush1.msra.mxu0 0.0
    %531 = vmatprep.subr.mxu0 0.0
    %532 = vmatpush1.msra.mxu0 0.0
    %533 = vmatprep.subr.mxu0 0.0
    %534 = vmatpush1.msra.mxu0 0.0
    %535 = vmatprep.subr.mxu0 0.0
    %536 = vmatpush1.msra.mxu0 0.0
    %537 = vmatprep.subr.mxu0 0.0
    %538 = vmatpush1.msra.mxu0 0.0
    %539 = vmatprep.subr.mxu0 0.0
    %540 = vmatpush1.msra.mxu0 0.0
    %541 = vmatprep.subr.mxu0 0.0
    %542 = vmatpush1.msra.mxu0 0.0
    %543 = vmatprep.subr.mxu0 0.0
    %544 = vmatpush1.msra.mxu0 0.0
    %545 = vmatprep.subr.mxu0 0.0
    %546 = vmatpush1.msra.mxu0 0.0
    %547 = vmatprep.subr.mxu0 0.0
    %548 = vmatpush1.msra.mxu0 %v494
    %549 = vmatprep.subr.mxu0 0.0
    %550 = vmatpush2.msra.mxu0 0.0
    %551 = vmatprep.subr.mxu0 0.0
    %552 = vmatpush2.msra.mxu0 0.0
    %553 = vmatprep.subr.mxu0 0.0
    %554 = vmatpush2.msra.mxu0 0.0
    %555 = vmatprep.subr.mxu0 0.0
    %556 = vmatpush2.msra.mxu0 0.0
    %557 = vmatprep.subr.mxu0 0.0
    %558 = vmatpush2.msra.mxu0 0.0
    %559 = vmatprep.subr.mxu0 0.0
    %560 = vmatpush2.msra.mxu0 0.0
    %561 = vmatprep.subr.mxu0 0.0
    %562 = vmatpush2.msra.mxu0 0.0
    %563 = vmatprep.subr.mxu0 0.0
    %564 = vmatpush2.msra.mxu0 0.0
    %565 = vmatprep.subr.mxu0 0.0
    %566 = vmatpush2.msra.mxu0 0.0
    %567 = vmatprep.subr.mxu0 0.0
    %568 = vmatpush2.msra.mxu0 0.0
    %569 = vmatprep.subr.mxu0 0.0
    %570 = vmatpush2.msra.mxu0 0.0
    %571 = vmatprep.subr.mxu0 0.0
    %572 = vmatpush2.msra.mxu0 0.0
    %573 = vmatprep.subr.mxu0 0.0
    %574 = vmatpush2.msra.mxu0 0.0
    %575 = vmatprep.subr.mxu0 0.0
    %576 = vmatpush2.msra.mxu0 0.0
    %577 = vmatprep.subr.mxu0 0.0
    %578 = vmatpush2.msra.mxu0 0.0
    %579 = vmatprep.subr.mxu0 0.0
    %580 = vmatpush2.msra.mxu0 0.0
    %581 = vmatprep.mubr.f32.mxu0 0.0
    %582 = vmatmul.mubr.f32.gmra.mxu0 %v497
    %v583 = vpop.f32.mrf.mxu0
    %v584 = vadd.f32 0.0, %v583
    %v585 = vpop.f32.mrf.mxu0
    %586 = vmatprep.mubr.f32.mxu0 0.0
    %587 = vmatmul.mubr.f32.gmra.mxu0 %v500
    %v588 = vpop.f32.mrf.mxu0
    %v589 = vadd.f32 0.0, %v588
    %v590 = vpop.f32.mrf.mxu0
    %591 = vmatprep.mubr.f32.mxu0 0.0
    %592 = vmatmul.mubr.f32.gmra.mxu0 %v503
    %v593 = vpop.f32.mrf.mxu0
    %v594 = vadd.f32 0.0, %v593
    %v595 = vpop.f32.mrf.mxu0
    %596 = vmatprep.mubr.f32.mxu0 0.0
    %597 = vmatmul.mubr.f32.gmra.mxu0 %v506
    %v598 = vpop.f32.mrf.mxu0
    %v599 = vadd.f32 0.0, %v598
    %v600 = vpop.f32.mrf.mxu0
    %601 = vmatprep.mubr.f32.mxu0 0.0
    %602 = vmatmul.mubr.f32.gmra.mxu0 %v509
    %v603 = vpop.f32.mrf.mxu0
    %v604 = vadd.f32 0.0, %v603
    %v605 = vpop.f32.mrf.mxu0
    %606 = vmatprep.mubr.f32.mxu0 0.0
    %607 = vmatmul.mubr.f32.gmra.mxu0 %v512
    %v608 = vpop.f32.mrf.mxu0
    %v609 = vadd.f32 0.0, %v608
    %v610 = vpop.f32.mrf.mxu0
    %611 = vmatprep.mubr.f32.mxu0 0.0
    %612 = vmatmul.mubr.f32.gmra.mxu0 %v515
    %v613 = vpop.f32.mrf.mxu0
    %v614 = vadd.f32 0.0, %v613
    %v615 = vpop.f32.mrf.mxu0
    %616 = vdwg.mxu0
    %v617 = vadd.f32 %v480, %v584
    %v618 = vadd.f32 %v481, %v589
    %v619 = vadd.f32 %v482, %v594
    %v620 = vadd.f32 %v483, %v599
    %v621 = vadd.f32 %v484, %v604
    %v622 = vadd.f32 %v485, %v609
    %v623 = vadd.f32 %v486, %v614
    %v624 = vld [vmem:[%s8] sm:$0x1]
    %v626 = vlaneseq
    %v627 = vshrl.u32 %v626, 7
    %v628 = vsub.s32 0, %v627
    %v629 = vrot.slane %v624, %v628
    %v631 = vadd.f32 %v617, %v629
    %v632 = vadd.f32 %v618, %v629
    %v633 = vadd.f32 %v619, %v629
    %v634 = vadd.f32 %v620, %v629
    %v635 = vadd.f32 %v621, %v629
    %v636 = vadd.f32 %v622, %v629
    %v637 = vadd.f32 %v623, %v629
    %v638 = vmax.f32 %v631, 0.0
    %v639 = vmax.f32 %v632, 0.0
    %v640 = vmax.f32 %v633, 0.0
    %v641 = vmax.f32 %v634, 0.0
    %v642 = vmax.f32 %v635, 0.0
    %v643 = vmax.f32 %v636, 0.0
    %v644 = vmax.f32 %v637, 0.0
    %v645 = vld [vmem:[%s9] sm:$0xff]
    %v646 = vld [vmem:[%s9 + $0x8] sm:$0xff]
    %v647 = vld [vmem:[%s9 + $0x10] sm:$0xff]
    %v648 = vld [vmem:[%s9 + $0x18] sm:$0xff]
    %v649 = vld [vmem:[%s9 + $0x20] sm:$0xff]
    %v650 = vld [vmem:[%s9 + $0x28] sm:$0xff]
    %v651 = vld [vmem:[%s9 + $0x30] sm:$0xff]
    %v652 = vld [vmem:[%s9 + $0x38] sm:$0xff]
    %v653 = vld [vmem:[%s9 + $0x40] sm:$0xff]
    %v654 = vld [vmem:[%s9 + $0x48] sm:$0xff]
    %v655 = vld [vmem:[%s9 + $0x50] sm:$0xff]
    %v656 = vld [vmem:[%s9 + $0x58] sm:$0xff]
    %v657 = vld [vmem:[%s9 + $0x60] sm:$0xff]
    %v658 = vld [vmem:[%s9 + $0x68] sm:$0xff]
    %v659 = vld [vmem:[%s9 + $0x70] sm:$0xff]
    %v660 = vld [vmem:[%s9 + $0x78] sm:$0xff]
    %v661 = vld [vmem:[%s10] sm:$0x1]
    %v663 = vlaneseq
    %v664 = vshrl.u32 %v663, 7
    %v665 = vsub.s32 0, %v664
    %v666 = vrot.slane %v661, %v665
    %668 = vmatprep.subr.mxu0 0.0
    %669 = vmatpush1.msra.mxu0 %v660
    %670 = vmatprep.subr.mxu0 0.0
    %671 = vmatpush1.msra.mxu0 %v659
    %672 = vmatprep.subr.mxu0 0.0
    %673 = vmatpush1.msra.mxu0 %v658
    %674 = vmatprep.subr.mxu0 0.0
    %675 = vmatpush1.msra.mxu0 %v657
    %676 = vmatprep.subr.mxu0 0.0
    %677 = vmatpush1.msra.mxu0 %v656
    %678 = vmatprep.subr.mxu0 0.0
    %679 = vmatpush1.msra.mxu0 %v655
    %680 = vmatprep.subr.mxu0 0.0
    %681 = vmatpush1.msra.mxu0 %v654
    %682 = vmatprep.subr.mxu0 0.0
    %683 = vmatpush1.msra.mxu0 %v653
    %684 = vmatprep.subr.mxu0 0.0
    %685 = vmatpush1.msra.mxu0 %v652
    %686 = vmatprep.subr.mxu0 0.0
    %687 = vmatpush1.msra.mxu0 %v651
    %688 = vmatprep.subr.mxu0 0.0
    %689 = vmatpush1.msra.mxu0 %v650
    %690 = vmatprep.subr.mxu0 0.0
    %691 = vmatpush1.msra.mxu0 %v649
    %692 = vmatprep.subr.mxu0 0.0
    %693 = vmatpush1.msra.mxu0 %v648
    %694 = vmatprep.subr.mxu0 0.0
    %695 = vmatpush1.msra.mxu0 %v647
    %696 = vmatprep.subr.mxu0 0.0
    %697 = vmatpush1.msra.mxu0 %v646
    %698 = vmatprep.subr.mxu0 0.0
    %699 = vmatpush1.msra.mxu0 %v645
    %700 = vmatprep.subr.mxu0 0.0
    %701 = vmatpush2.msra.mxu0 0.0
    %702 = vmatprep.subr.mxu0 0.0
    %703 = vmatpush2.msra.mxu0 0.0
    %704 = vmatprep.subr.mxu0 0.0
    %705 = vmatpush2.msra.mxu0 0.0
    %706 = vmatprep.subr.mxu0 0.0
    %707 = vmatpush2.msra.mxu0 0.0
    %708 = vmatprep.subr.mxu0 0.0
    %709 = vmatpush2.msra.mxu0 0.0
    %710 = vmatprep.subr.mxu0 0.0
    %711 = vmatpush2.msra.mxu0 0.0
    %712 = vmatprep.subr.mxu0 0.0
    %713 = vmatpush2.msra.mxu0 0.0
    %714 = vmatprep.subr.mxu0 0.0
    %715 = vmatpush2.msra.mxu0 0.0
    %716 = vmatprep.subr.mxu0 0.0
    %717 = vmatpush2.msra.mxu0 0.0
    %718 = vmatprep.subr.mxu0 0.0
    %719 = vmatpush2.msra.mxu0 0.0
    %720 = vmatprep.subr.mxu0 0.0
    %721 = vmatpush2.msra.mxu0 0.0
    %722 = vmatprep.subr.mxu0 0.0
    %723 = vmatpush2.msra.mxu0 0.0
    %724 = vmatprep.subr.mxu0 0.0
    %725 = vmatpush2.msra.mxu0 0.0
    %726 = vmatprep.subr.mxu0 0.0
    %727 = vmatpush2.msra.mxu0 0.0
    %728 = vmatprep.subr.mxu0 0.0
    %729 = vmatpush2.msra.mxu0 0.0
    %730 = vmatprep.subr.mxu0 0.0
    %731 = vmatpush2.msra.mxu0 0.0
    %732 = vmatprep.mubr.f32.mxu0 0.0
    %733 = vmatmul.mubr.f32.gmra.mxu0 %v638
    %v734 = vpop.f32.mrf.mxu0
    %v735 = vadd.f32 %v666, %v734
    %v736 = vpop.f32.mrf.mxu0
    %737 = vmatprep.mubr.f32.mxu0 0.0
    %738 = vmatmul.mubr.f32.gmra.mxu0 %v639
    %v739 = vpop.f32.mrf.mxu0
    %v740 = vadd.f32 %v666, %v739
    %v741 = vpop.f32.mrf.mxu0
    %742 = vmatprep.mubr.f32.mxu0 0.0
    %743 = vmatmul.mubr.f32.gmra.mxu0 %v640
    %v744 = vpop.f32.mrf.mxu0
    %v745 = vadd.f32 %v666, %v744
    %v746 = vpop.f32.mrf.mxu0
    %747 = vmatprep.mubr.f32.mxu0 0.0
    %748 = vmatmul.mubr.f32.gmra.mxu0 %v641
    %v749 = vpop.f32.mrf.mxu0
    %v750 = vadd.f32 %v666, %v749
    %v751 = vpop.f32.mrf.mxu0
    %752 = vmatprep.mubr.f32.mxu0 0.0
    %753 = vmatmul.mubr.f32.gmra.mxu0 %v642
    %v754 = vpop.f32.mrf.mxu0
    %v755 = vadd.f32 %v666, %v754
    %v756 = vpop.f32.mrf.mxu0
    %757 = vmatprep.mubr.f32.mxu0 0.0
    %758 = vmatmul.mubr.f32.gmra.mxu0 %v643
    %v759 = vpop.f32.mrf.mxu0
    %v760 = vadd.f32 %v666, %v759
    %v761 = vpop.f32.mrf.mxu0
    %762 = vmatprep.mubr.f32.mxu0 0.0
    %763 = vmatmul.mubr.f32.gmra.mxu0 %v644
    %v764 = vpop.f32.mrf.mxu0
    %v765 = vadd.f32 %v666, %v764
    %v766 = vpop.f32.mrf.mxu0
    %767 = vdwg.mxu0
    %v768 = vmax.f32 %v735, 0.0
    %v769 = vmax.f32 %v740, 0.0
    %v770 = vmax.f32 %v745, 0.0
    %v771 = vmax.f32 %v750, 0.0
    %v772 = vmax.f32 %v755, 0.0
    %v773 = vmax.f32 %v760, 0.0
    %v774 = vmax.f32 %v765, 0.0
    %v775 = vld [vmem:[%s11] sm:$0xff]
    %v776 = vld [vmem:[%s11 + $0x8] sm:$0xff]
    %v777 = vld [vmem:[%s11 + $0x10] sm:$0xff]
    %v778 = vld [vmem:[%s11 + $0x18] sm:$0xff]
    %v779 = vld [vmem:[%s11 + $0x20] sm:$0xff]
    %v780 = vld [vmem:[%s11 + $0x28] sm:$0xff]
    %v781 = vld [vmem:[%s11 + $0x30] sm:$0xff]
    %v782 = vld [vmem:[%s11 + $0x38] sm:$0xff]
    %v783 = vld [vmem:[%s11 + $0x40] sm:$0xff]
    %v784 = vld [vmem:[%s11 + $0x48] sm:$0xff]
    %v785 = vld [vmem:[%s11 + $0x50] sm:$0xff]
    %v786 = vld [vmem:[%s11 + $0x58] sm:$0xff]
    %v787 = vld [vmem:[%s11 + $0x60] sm:$0xff]
    %v788 = vld [vmem:[%s11 + $0x68] sm:$0xff]
    %v789 = vld [vmem:[%s11 + $0x70] sm:$0xff]
    %v790 = vld [vmem:[%s11 + $0x78] sm:$0xff]
    %v791 = vld [vmem:[%s12] sm:$0x1]
    %v793 = vlaneseq
    %v794 = vshrl.u32 %v793, 7
    %v795 = vsub.s32 0, %v794
    %v796 = vrot.slane %v791, %v795
    %798 = vmatprep.subr.mxu0 0.0
    %799 = vmatpush1.msra.mxu0 %v790
    %800 = vmatprep.subr.mxu0 0.0
    %801 = vmatpush1.msra.mxu0 %v789
    %802 = vmatprep.subr.mxu0 0.0
    %803 = vmatpush1.msra.mxu0 %v788
    %804 = vmatprep.subr.mxu0 0.0
    %805 = vmatpush1.msra.mxu0 %v787
    %806 = vmatprep.subr.mxu0 0.0
    %807 = vmatpush1.msra.mxu0 %v786
    %808 = vmatprep.subr.mxu0 0.0
    %809 = vmatpush1.msra.mxu0 %v785
    %810 = vmatprep.subr.mxu0 0.0
    %811 = vmatpush1.msra.mxu0 %v784
    %812 = vmatprep.subr.mxu0 0.0
    %813 = vmatpush1.msra.mxu0 %v783
    %814 = vmatprep.subr.mxu0 0.0
    %815 = vmatpush1.msra.mxu0 %v782
    %816 = vmatprep.subr.mxu0 0.0
    %817 = vmatpush1.msra.mxu0 %v781
    %818 = vmatprep.subr.mxu0 0.0
    %819 = vmatpush1.msra.mxu0 %v780
    %820 = vmatprep.subr.mxu0 0.0
    %821 = vmatpush1.msra.mxu0 %v779
    %822 = vmatprep.subr.mxu0 0.0
    %823 = vmatpush1.msra.mxu0 %v778
    %824 = vmatprep.subr.mxu0 0.0
    %825 = vmatpush1.msra.mxu0 %v777
    %826 = vmatprep.subr.mxu0 0.0
    %827 = vmatpush1.msra.mxu0 %v776
    %828 = vmatprep.subr.mxu0 0.0
    %829 = vmatpush1.msra.mxu0 %v775
    %830 = vmatprep.subr.mxu0 0.0
    %831 = vmatpush2.msra.mxu0 0.0
    %832 = vmatprep.subr.mxu0 0.0
    %833 = vmatpush2.msra.mxu0 0.0
    %834 = vmatprep.subr.mxu0 0.0
    %835 = vmatpush2.msra.mxu0 0.0
    %836 = vmatprep.subr.mxu0 0.0
    %837 = vmatpush2.msra.mxu0 0.0
    %838 = vmatprep.subr.mxu0 0.0
    %839 = vmatpush2.msra.mxu0 0.0
    %840 = vmatprep.subr.mxu0 0.0
    %841 = vmatpush2.msra.mxu0 0.0
    %842 = vmatprep.subr.mxu0 0.0
    %843 = vmatpush2.msra.mxu0 0.0
    %844 = vmatprep.subr.mxu0 0.0
    %845 = vmatpush2.msra.mxu0 0.0
    %846 = vmatprep.subr.mxu0 0.0
    %847 = vmatpush2.msra.mxu0 0.0
    %848 = vmatprep.subr.mxu0 0.0
    %849 = vmatpush2.msra.mxu0 0.0
    %850 = vmatprep.subr.mxu0 0.0
    %851 = vmatpush2.msra.mxu0 0.0
    %852 = vmatprep.subr.mxu0 0.0
    %853 = vmatpush2.msra.mxu0 0.0
    %854 = vmatprep.subr.mxu0 0.0
    %855 = vmatpush2.msra.mxu0 0.0
    %856 = vmatprep.subr.mxu0 0.0
    %857 = vmatpush2.msra.mxu0 0.0
    %858 = vmatprep.subr.mxu0 0.0
    %859 = vmatpush2.msra.mxu0 0.0
    %860 = vmatprep.subr.mxu0 0.0
    %861 = vmatpush2.msra.mxu0 0.0
    %862 = vmatprep.mubr.f32.mxu0 0.0
    %863 = vmatmul.mubr.f32.gmra.mxu0 %v768
    %v864 = vpop.f32.mrf.mxu0
    %v865 = vadd.f32 %v796, %v864
    %v866 = vpop.f32.mrf.mxu0
    %867 = vmatprep.mubr.f32.mxu0 0.0
    %868 = vmatmul.mubr.f32.gmra.mxu0 %v769
    %v869 = vpop.f32.mrf.mxu0
    %v870 = vadd.f32 %v796, %v869
    %v871 = vpop.f32.mrf.mxu0
    %872 = vmatprep.mubr.f32.mxu0 0.0
    %873 = vmatmul.mubr.f32.gmra.mxu0 %v770
    %v874 = vpop.f32.mrf.mxu0
    %v875 = vadd.f32 %v796, %v874
    %v876 = vpop.f32.mrf.mxu0
    %877 = vmatprep.mubr.f32.mxu0 0.0
    %878 = vmatmul.mubr.f32.gmra.mxu0 %v771
    %v879 = vpop.f32.mrf.mxu0
    %v880 = vadd.f32 %v796, %v879
    %v881 = vpop.f32.mrf.mxu0
    %882 = vmatprep.mubr.f32.mxu0 0.0
    %883 = vmatmul.mubr.f32.gmra.mxu0 %v772
    %v884 = vpop.f32.mrf.mxu0
    %v885 = vadd.f32 %v796, %v884
    %v886 = vpop.f32.mrf.mxu0
    %887 = vmatprep.mubr.f32.mxu0 0.0
    %888 = vmatmul.mubr.f32.gmra.mxu0 %v773
    %v889 = vpop.f32.mrf.mxu0
    %v890 = vadd.f32 %v796, %v889
    %v891 = vpop.f32.mrf.mxu0
    %892 = vmatprep.mubr.f32.mxu0 0.0
    %893 = vmatmul.mubr.f32.gmra.mxu0 %v774
    %v894 = vpop.f32.mrf.mxu0
    %v895 = vadd.f32 %v796, %v894
    %v896 = vpop.f32.mrf.mxu0
    %897 = vdwg.mxu0
    %v898 = vmax.f32 %v865, 0.0
    %v899 = vmax.f32 %v870, 0.0
    %v900 = vmax.f32 %v875, 0.0
    %v901 = vmax.f32 %v880, 0.0
    %v902 = vmax.f32 %v885, 0.0
    %v903 = vmax.f32 %v890, 0.0
    %v904 = vmax.f32 %v895, 0.0
    %905 = vst [vmem:[#allocation8] sm:$0xff] %v898
    %906 = vst [vmem:[#allocation8 + $0x8] sm:$0xff] %v899
    %907 = vst [vmem:[#allocation8 + $0x10] sm:$0xff] %v900
    %908 = vst [vmem:[#allocation8 + $0x18] sm:$0xff] %v901
    %909 = vst [vmem:[#allocation8 + $0x20] sm:$0xff] %v902
    %910 = vst [vmem:[#allocation8 + $0x28] sm:$0xff] %v903
    %911 = vst [vmem:[#allocation8 + $0x30] sm:$0xff] %v904
    // Predicated region
    $region66: #{tpu_custom_call.1} parent=1 // pred_check
      _
    $region67: #{tpu_custom_call.1} parent=1 // pred_check_branch
      %913 = sbr.rel (0) target = $region69
    $region68: #{tpu_custom_call.1} parent=1 // pred_region
      %s915 = ssub.s32 896, 896
      %916 = vsyncadd [#allocation4], %s915
      %s917 = sshll.u32 [#allocation8], 4
      %s918 = int_to_ptr.vmem [resolvable:$true] %s917
      %923 = dma.vmem_to_hbm [thread:$0]  %s918, 896, %s13, [#allocation4], 128, 128, 8
    $region69: #{tpu_custom_call.1} parent=1 // pred_fallthru
      _
    // Predicated region
    $region70: #{tpu_custom_call.1} parent=1 // pred_check
      _
    $region71: #{tpu_custom_call.1} parent=1 // pred_check_branch
      %925 = sbr.rel (0) target = $region73
    $region72: #{tpu_custom_call.1} parent=1 // pred_region
      %926 = dma.done [#allocation4], 896
    $region73: #{tpu_custom_call.1} parent=1 // pred_fallthru
      _
    %927 = vsyncpa [#allocation3], 1
    %928 = vsyncpa [#allocation6], 1
    %929 = vsyncpa [#allocation4], 1

</llo_original>
